<compile_context>
chip_gen: v5e
topology: v5e:2x2
jax: 0.10.0
libtpu: 0.0.40
codegen_flags: <defaults>
</compile_context>

<pallas_src>
import functools

import jax
import jax.numpy as jnp
from jax import lax
from jax.experimental import pallas as pl
from jax.experimental.pallas import tpu as pltpu

S_DIM = 8                    # state features
A_DIM = 1                    # action features  (S_DIM + A_DIM == 9 -> nn.Linear(9, 100))
K_IN = S_DIM + A_DIM + 1     # [s | a | 1]  (the trailing 1 carries both biases)
K_PAD = 16                   # contraction dim padded to a sublane-friendly size
HID = 100                    # hidden width of fc
HID_PAD = 128                # hidden width padded to a full sublane tile


def _round_up(x, m):
    return ((x + m - 1) // m) * m


def critic_kernel(x_ref, w1_ref, w2_ref, out_ref, *, chunk, n_chunks):
    # x_ref  : (K_PAD, TB)     [s; a; 1; 0] with batch on lanes
    # w1_ref : (HID_PAD, K_PAD) fc weight | action col | fc bias col (+ const-1 unit)
    # w2_ref : (1, HID_PAD)     v_head weight row (includes v_head bias at col HID)
    # out_ref: (1, TB)          state value, batch on lanes
    w1 = w1_ref[...]
    w2 = w2_ref[...]

    def body(c, carry):
        off = pl.multiple_of(c * chunk, chunk)
        xc = x_ref[:, pl.ds(off, chunk)]                       # (K_PAD, chunk)
        # h = relu(W1 @ [s;a] + b1)  -- single MXU matmul (bias folded), VPU only ReLUs
        h = jnp.maximum(
            jnp.dot(w1, xc, preferred_element_type=jnp.float32), 0.0)
        # v = w2 . h + b2  -- second MXU matmul (b2 folded via the const-1 hidden unit)
        v = jnp.dot(w2, h, preferred_element_type=jnp.float32)  # (1, chunk)
        out_ref[:, pl.ds(off, chunk)] = v.astype(out_ref.dtype)
        return carry

    lax.fori_loop(0, n_chunks, body, 0, unroll=True)


def prepare_params(params):
    """One-time preprocessing of PyTorch-layout params into kernel layout."""
    w1, b1, w2, b2 = params          # (100, 9), (100,), (1, 100), (1,)
    w1 = w1.astype(jnp.float32)
    b1 = b1.astype(jnp.float32)
    w2 = w2.astype(jnp.float32)
    b2 = b2.astype(jnp.float32)

    # W1ext @ [s; a; 1] == w1 @ [s; a] + b1     (fc bias folded into the matmul)
    w1ext = jnp.zeros((HID_PAD, K_PAD), jnp.float32)
    w1ext = w1ext.at[:HID, :S_DIM + A_DIM].set(w1)
    w1ext = w1ext.at[:HID, S_DIM + A_DIM].set(b1)
    # Constant-1 hidden unit at row HID (relu(1*ones_row)=1 for real lanes) so the
    # v_head bias rides in the second matmul; padded/zero lanes stay exactly 0.
    w1ext = w1ext.at[HID, S_DIM + A_DIM].set(1.0)

    w2row = jnp.zeros((1, HID_PAD), jnp.float32)
    w2row = w2row.at[0, :HID].set(w2[0])
    w2row = w2row.at[0, HID].set(b2[0])
    return (w1ext, w2row)


def _choose_tb(B):
    bp128 = _round_up(B, 128)
    if bp128 <= 256:
        return bp128                         # whole (padded) batch in one small tile
    # Big tiles to amortize per-grid-step overhead, but keep ~4+ tiles so the
    # "parallel" axis actually feeds both v7x TensorCores.  VMEM is not a limit.
    tb = _round_up(-(-bp128 // 4), 256)
    return max(256, min(2048, tb))


def critic_forward(s, a, prepared, *, tb=None):
    """Pallas equivalent of CriticNet.forward(s, a). Returns (B, 1) f32."""
    w1ext, w2row = prepared
    B = s.shape[0]

    if tb is None:
        tb = _choose_tb(B)
    tb = _round_up(tb, 128)
    if tb > 128:
        tb = _round_up(tb, 256)              # keep tb a multiple of the inner chunk
    chunk = min(256, tb)
    n_chunks = tb // chunk
    Bp = _round_up(B, tb)

    # Single fused layout op: [s | a | 1] -> transpose -> pad (feature & batch).
    xin = jnp.concatenate(
        [s.astype(jnp.float32), a.astype(jnp.float32),
         jnp.ones((B, 1), jnp.float32)], axis=1)                 # (B, K_IN)
    x_t = jnp.pad(xin.T, ((0, K_PAD - K_IN), (0, Bp - B)))       # (K_PAD, Bp)

    grid = (Bp // tb,)
    kernel = functools.partial(critic_kernel, chunk=chunk, n_chunks=n_chunks)

    out = pl.pallas_call(
        kernel,
        out_shape=jax.ShapeDtypeStruct((1, Bp), jnp.float32),
        grid=grid,
        in_specs=[
            pl.BlockSpec((K_PAD, tb), lambda i: (0, i)),          # fused input tile
            pl.BlockSpec((HID_PAD, K_PAD), lambda i: (0, 0)),     # weights: VMEM-resident
            pl.BlockSpec((1, HID_PAD), lambda i: (0, 0)),
        ],
        out_specs=pl.BlockSpec((1, tb), lambda i: (0, i)),        # lane-dense output
        compiler_params=pltpu.CompilerParams(
            dimension_semantics=("parallel",),
        ),
    )(x_t, w1ext, w2row)

    return out[0, :B].reshape(B, 1)


def init_params(key):
    """Deterministic init matching PyTorch nn.Linear default (U(-1/sqrt(fan_in), +))."""
    k1, k2, k3, k4 = jax.random.split(key, 4)
    bound1 = 1.0 / jnp.sqrt(9.0)
    w1 = jax.random.uniform(k1, (HID, 9), jnp.float32, -bound1, bound1)
    b1 = jax.random.uniform(k2, (HID,), jnp.float32, -bound1, bound1)
    bound2 = 1.0 / jnp.sqrt(float(HID))
    w2 = jax.random.uniform(k3, (1, HID), jnp.float32, -bound2, bound2)
    b2 = jax.random.uniform(k4, (1,), jnp.float32, -bound2, bound2)
    return (w1, b1, w2, b2)


def critic_ref(s, a, params):
    """Pure-JAX reference of the PyTorch forward."""
    w1, b1, w2, b2 = params
    x = jnp.concatenate([s, a], axis=1)
    h = jnp.maximum(x @ w1.T + b1, 0.0)
    return h @ w2.T + b2


if __name__ == "__main__":
    key = jax.random.PRNGKey(0)
    kp, ks, ka, ks2, ka2, ks3, ka3 = jax.random.split(key, 7)

    params = init_params(kp)
    prepared = prepare_params(params)

    fwd = jax.jit(functools.partial(critic_forward, tb=None))

    # Small case (B=8): single 128-lane tile, single inner chunk.
    B = 8
    s = jax.random.normal(ks, (B, S_DIM), jnp.float32)
    a = jax.random.normal(ka, (B, A_DIM), jnp.float32)
    out = jax.block_until_ready(fwd(s, a, prepared))
    ref = critic_ref(s, a, params)
    assert out.shape == (B, 1)
    assert jnp.allclose(out, ref, atol=1e-5, rtol=1e-5), "mismatch vs reference (B=8)"

    # Multi-tile case: exercises the batch grid (2 tiles of 256) + tail padding.
    B2 = 300
    s2 = jax.random.normal(ks2, (B2, S_DIM), jnp.float32)
    a2 = jax.random.normal(ka2, (B2, A_DIM), jnp.float32)
    out2 = jax.block_until_ready(critic_forward(s2, a2, prepared, tb=256))
    ref2 = critic_ref(s2, a2, params)
    assert out2.shape == (B2, 1)
    assert jnp.allclose(out2, ref2, atol=1e-5, rtol=1e-5), "mismatch vs reference (B=300)"

    # Big-tile case: exercises the inner lane-chunk loop (tb=512 -> 2 chunks of 256)
    # plus multiple grid steps for the parallel axis.
    B3 = 600
    s3 = jax.random.normal(ks3, (B3, S_DIM), jnp.float32)
    a3 = jax.random.normal(ka3, (B3, A_DIM), jnp.float32)
    out3 = jax.block_until_ready(critic_forward(s3, a3, prepared, tb=512))
    ref3 = critic_ref(s3, a3, params)
    assert out3.shape == (B3, 1)
    assert jnp.allclose(out3, ref3, atol=1e-5, rtol=1e-5), "mismatch vs reference (B=600)"

    print("KERNEL_OK")
</pallas_src>

<mosaic_0001>
module attributes {stable_mosaic.version = 11 : i64} {
  func.func @critic_kernel(%arg0: i32, %arg1: memref<16x128xf32, #tpu.memory_space<vmem>>, %arg2: memref<128x16xf32, #tpu.memory_space<vmem>>, %arg3: memref<1x128xf32, #tpu.memory_space<vmem>>, %arg4: memref<1x128xf32, #tpu.memory_space<vmem>>) attributes {dimension_semantics = [#tpu.dimension_semantics<parallel>], iteration_bounds = array<i64: 1>, scalar_prefetch = 0 : i64, scratch_operands = 0 : i64, tpu.core_type = #tpu.core_type<tc>, window_params = [{transform_indices = @transform_0, window_bounds = array<i64: 16, 128>}, {pipeline_mode = #tpu.pipeline_mode<synchronous>, transform_indices = @transform_1, window_bounds = array<i64: 128, 16>}, {pipeline_mode = #tpu.pipeline_mode<synchronous>, transform_indices = @transform_2, window_bounds = array<i64: 1, 128>}, {transform_indices = @transform_3, window_bounds = array<i64: 1, 128>}]} {
    %c0 = arith.constant 0 : index
    %c0_0 = arith.constant 0 : index
    %0 = vector.load %arg2[%c0, %c0_0] : memref<128x16xf32, #tpu.memory_space<vmem>>, vector<128x16xf32>
    %c0_1 = arith.constant 0 : index
    %c0_2 = arith.constant 0 : index
    %1 = vector.load %arg3[%c0_1, %c0_2] : memref<1x128xf32, #tpu.memory_space<vmem>>, vector<1x128xf32>
    %c0_i32 = arith.constant 0 : i32
    %c128_i32 = arith.constant 128 : i32
    %2 = arith.muli %c0_i32, %c128_i32 : i32
    %3 = tpu.assume_multiple %2, 128 : i32
    %c0_3 = arith.constant 0 : index
    %4 = arith.index_cast %3 : i32 to index
    %5 = vector.load %arg1[%c0_3, %4] : memref<16x128xf32, #tpu.memory_space<vmem>>, vector<16x128xf32>
    %cst = arith.constant dense<0.000000e+00> : vector<128x128xf32>
    %6 = tpu.matmul %0, %5, %cst {dimension_numbers = #tpu.dot_dimension_numbers<[1], [0], [0], [1], [0, 0, 1, 1], [], []>} : vector<128x16xf32>, vector<16x128xf32>, vector<128x128xf32> -> vector<128x128xf32>
    %cst_4 = arith.constant 0.000000e+00 : f32
    %7 = vector.broadcast %cst_4 : f32 to vector<128x128xf32>
    %8 = arith.maximumf %6, %7 : vector<128x128xf32>
    %cst_5 = arith.constant dense<0.000000e+00> : vector<1x128xf32>
    %9 = tpu.matmul %1, %8, %cst_5 {dimension_numbers = #tpu.dot_dimension_numbers<[1], [0], [0], [1], [0, 0, 1, 1], [], []>} : vector<1x128xf32>, vector<128x128xf32>, vector<1x128xf32> -> vector<1x128xf32>
    %c0_6 = arith.constant 0 : index
    %10 = arith.index_cast %3 : i32 to index
    %11 = vector.load %arg4[%c0_6, %10] : memref<1x128xf32, #tpu.memory_space<vmem>>, vector<1x128xf32>
    tpu.vector_store %arg4[%c0_6, %10], %9 {strides = array<i32>} : memref<1x128xf32, #tpu.memory_space<vmem>>, vector<1x128xf32>,
    %c1_i32 = arith.constant 1 : i32
    return
  }
  func.func @transform_0(%arg0: i32) -> (i32, i32) {
    %c0_i32 = arith.constant 0 : i32
    %c0_i32_0 = arith.constant 0 : i32
    return %c0_i32, %arg0 : i32, i32
  }
  func.func @transform_1(%arg0: i32) -> (i32, i32) {
    %c0_i32 = arith.constant 0 : i32
    %c0_i32_0 = arith.constant 0 : i32
    %c0_i32_1 = arith.constant 0 : i32
    return %c0_i32, %c0_i32_0 : i32, i32
  }
  func.func @transform_2(%arg0: i32) -> (i32, i32) {
    %c0_i32 = arith.constant 0 : i32
    %c0_i32_0 = arith.constant 0 : i32
    %c0_i32_1 = arith.constant 0 : i32
    return %c0_i32, %c0_i32_0 : i32, i32
  }
  func.func @transform_3(%arg0: i32) -> (i32, i32) {
    %c0_i32 = arith.constant 0 : i32
    %c0_i32_0 = arith.constant 0 : i32
    return %c0_i32, %arg0 : i32, i32
  }
}

</mosaic_0001>

<llo_original>
// kernel: critic_forward.1
$region0: #{critic_forward.1}
  #allocation0 [shape = 'u32[]', space=smem, size = 0x4, offset = 0x4, fixed_abs, tag = 'smem constant byte address 0x4 - core index']
  #allocation1 [shape = 'u32[72,128]{1,0:T(1,128)}', space=vmem, size = 0x9000, scoped, tag = 'internal scratch']
  %s0 = inlined_call_operand.vmem [shape: f32[16,128], index: 0, kind: input, shape index: {}]
  %s1 = inlined_call_operand.vmem [shape: f32[128,16], index: 1, kind: input, shape index: {}]
  %s2 = inlined_call_operand.vmem [shape: f32[1,128], index: 2, kind: input, shape index: {}]
  %s3 = inlined_call_operand.vmem [shape: f32[1,128], index: 3, kind: output, shape index: {}]
  %s4 = sld [smem:[#allocation0]]
  $region22: #{critic_forward.1} parent=0
    _
  %s6 = ssub.s32 1, %s4
  %s7 = scalar_select 0, %s6, %s4
  // Predicated region
  $region2: #{critic_forward.1} parent=0 // pred_check
    _
  $region3: #{critic_forward.1} parent=0 // pred_check_branch
    %9 = sbr.rel (0) target = $region5
  $region4: #{critic_forward.1} parent=0 // pred_region
    _
  $region5: #{critic_forward.1} parent=0 // pred_fallthru
    _
  // Predicated region
  $region6: #{critic_forward.1} parent=0 // pred_check
    _
  $region7: #{critic_forward.1} parent=0 // pred_check_branch
    %11 = sbr.rel (0) target = $region9
  $region8: #{critic_forward.1} parent=0 // pred_region
    _
  $region9: #{critic_forward.1} parent=0 // pred_fallthru
    _
  // Predicated region
  $region10: #{critic_forward.1} parent=0 // pred_check
    _
  $region11: #{critic_forward.1} parent=0 // pred_check_branch
    %13 = sbr.rel (0) target = $region13
  $region12: #{critic_forward.1} parent=0 // pred_region
    _
  $region13: #{critic_forward.1} parent=0 // pred_fallthru
    _
  %v14 = vld [vmem:[%s1] sm:$0xff]
  %v15 = vld [vmem:[%s1 + $0x8] sm:$0xff]
  %v16 = vld [vmem:[%s1 + $0x10] sm:$0xff]
  %v17 = vld [vmem:[%s1 + $0x18] sm:$0xff]
  %v18 = vld [vmem:[%s1 + $0x20] sm:$0xff]
  %v19 = vld [vmem:[%s1 + $0x28] sm:$0xff]
  %v20 = vld [vmem:[%s1 + $0x30] sm:$0xff]
  %v21 = vld [vmem:[%s1 + $0x38] sm:$0xff]
  %v22 = vld [vmem:[%s1 + $0x40] sm:$0xff]
  %v23 = vld [vmem:[%s1 + $0x48] sm:$0xff]
  %v24 = vld [vmem:[%s1 + $0x50] sm:$0xff]
  %v25 = vld [vmem:[%s1 + $0x58] sm:$0xff]
  %v26 = vld [vmem:[%s1 + $0x60] sm:$0xff]
  %v27 = vld [vmem:[%s1 + $0x68] sm:$0xff]
  %v28 = vld [vmem:[%s1 + $0x70] sm:$0xff]
  %v29 = vld [vmem:[%s1 + $0x78] sm:$0xff]
  %v30 = vld [vmem:[%s2] sm:$0x1]
  %v31 = vld [vmem:[%s0] sm:$0xff]
  %v32 = vld [vmem:[%s0 + $0x8] sm:$0xff]
  %vm33 = vcmask 130048
  %v35 = vsel %vm33, %v14, 0
  %v38 = vsel %vm33, %v15, 0
  %v41 = vsel %vm33, %v16, 0
  %v44 = vsel %vm33, %v17, 0
  %v47 = vsel %vm33, %v18, 0
  %v50 = vsel %vm33, %v19, 0
  %v53 = vsel %vm33, %v20, 0
  %v56 = vsel %vm33, %v21, 0
  %v59 = vsel %vm33, %v22, 0
  %v62 = vsel %vm33, %v23, 0
  %v65 = vsel %vm33, %v24, 0
  %v68 = vsel %vm33, %v25, 0
  %v71 = vsel %vm33, %v26, 0
  %v74 = vsel %vm33, %v27, 0
  %v77 = vsel %vm33, %v28, 0
  %v80 = vsel %vm33, %v29, 0
  %82 = vmatpush.msra.mxu0 0.0
  %83 = vmatpush.msra.mxu0 0.0
  %84 = vmatpush.msra.mxu0 0.0
  %85 = vmatpush.msra.mxu0 0.0
  %86 = vmatpush.msra.mxu0 0.0
  %87 = vmatpush.msra.mxu0 0.0
  %88 = vmatpush.msra.mxu0 0.0
  %89 = vmatpush.msra.mxu0 0.0
  %90 = vmatpush.msra.mxu0 0.0
  %91 = vmatpush.msra.mxu0 0.0
  %92 = vmatpush.msra.mxu0 0.0
  %93 = vmatpush.msra.mxu0 0.0
  %94 = vmatpush.msra.mxu0 0.0
  %95 = vmatpush.msra.mxu0 0.0
  %96 = vmatpush.msra.mxu0 %v32
  %97 = vmatpush.msra.mxu0 %v31
  %98 = vmatmul.f32.gmra.mxu0 %v35
  %v99 = vpop.f32.mrf.mxu0
  %v100 = vadd.f32 0.0, %v99
  %101 = vmatmul.f32.gmra.mxu0 %v38
  %v102 = vpop.f32.mrf.mxu0
  %v103 = vadd.f32 0.0, %v102
  %104 = vmatmul.f32.gmra.mxu0 %v41
  %v105 = vpop.f32.mrf.mxu0
  %v106 = vadd.f32 0.0, %v105
  %107 = vmatmul.f32.gmra.mxu0 %v44
  %v108 = vpop.f32.mrf.mxu0
  %v109 = vadd.f32 0.0, %v108
  %110 = vmatmul.f32.gmra.mxu0 %v47
  %v111 = vpop.f32.mrf.mxu0
  %v112 = vadd.f32 0.0, %v111
  %113 = vmatmul.f32.gmra.mxu0 %v50
  %v114 = vpop.f32.mrf.mxu0
  %v115 = vadd.f32 0.0, %v114
  %116 = vmatmul.f32.gmra.mxu0 %v53
  %v117 = vpop.f32.mrf.mxu0
  %v118 = vadd.f32 0.0, %v117
  %119 = vmatmul.f32.gmra.mxu0 %v56
  %v120 = vpop.f32.mrf.mxu0
  %v121 = vadd.f32 0.0, %v120
  %122 = vmatmul.f32.gmra.mxu0 %v59
  %v123 = vpop.f32.mrf.mxu0
  %v124 = vadd.f32 0.0, %v123
  %125 = vmatmul.f32.gmra.mxu0 %v62
  %v126 = vpop.f32.mrf.mxu0
  %v127 = vadd.f32 0.0, %v126
  %128 = vmatmul.f32.gmra.mxu0 %v65
  %v129 = vpop.f32.mrf.mxu0
  %v130 = vadd.f32 0.0, %v129
  %131 = vmatmul.f32.gmra.mxu0 %v68
  %v132 = vpop.f32.mrf.mxu0
  %v133 = vadd.f32 0.0, %v132
  %134 = vmatmul.f32.gmra.mxu0 %v71
  %v135 = vpop.f32.mrf.mxu0
  %v136 = vadd.f32 0.0, %v135
  %137 = vmatmul.f32.gmra.mxu0 %v74
  %v138 = vpop.f32.mrf.mxu0
  %v139 = vadd.f32 0.0, %v138
  %140 = vmatmul.f32.gmra.mxu0 %v77
  %v141 = vpop.f32.mrf.mxu0
  %v142 = vadd.f32 0.0, %v141
  %143 = vmatmul.f32.gmra.mxu0 %v80
  %v144 = vpop.f32.mrf.mxu0
  %v145 = vadd.f32 0.0, %v144
  %146 = vdwg.mxu0
  %v147 = vmax.f32 %v100, 0.0
  %v148 = vmax.f32 %v103, 0.0
  %v149 = vmax.f32 %v106, 0.0
  %v150 = vmax.f32 %v109, 0.0
  %v151 = vmax.f32 %v112, 0.0
  %v152 = vmax.f32 %v115, 0.0
  %v153 = vmax.f32 %v118, 0.0
  %v154 = vmax.f32 %v121, 0.0
  %v155 = vmax.f32 %v124, 0.0
  %v156 = vmax.f32 %v127, 0.0
  %v157 = vmax.f32 %v130, 0.0
  %v158 = vmax.f32 %v133, 0.0
  %v159 = vmax.f32 %v136, 0.0
  %v160 = vmax.f32 %v139, 0.0
  %v161 = vmax.f32 %v142, 0.0
  %v162 = vmax.f32 %v145, 0.0
  %163 = vmatpush.msra.mxu0 %v162
  %164 = vmatpush.msra.mxu0 %v161
  %165 = vmatpush.msra.mxu0 %v160
  %166 = vmatpush.msra.mxu0 %v159
  %167 = vmatpush.msra.mxu0 %v158
  %168 = vmatpush.msra.mxu0 %v157
  %169 = vmatpush.msra.mxu0 %v156
  %170 = vmatpush.msra.mxu0 %v155
  %171 = vmatpush.msra.mxu0 %v154
  %172 = vmatpush.msra.mxu0 %v153
  %173 = vmatpush.msra.mxu0 %v152
  %174 = vmatpush.msra.mxu0 %v151
  %175 = vmatpush.msra.mxu0 %v150
  %176 = vmatpush.msra.mxu0 %v149
  %177 = vmatpush.msra.mxu0 %v148
  %178 = vmatpush.msra.mxu0 %v147
  %179 = vmatmul.f32.gmra.mxu0 %v30
  %v180 = vpop.f32.mrf.mxu0
  %v181 = vadd.f32 0.0, %v180
  %182 = vdwg.mxu0
  %183 = vst [vmem:[%s3] sm:$0x1] %v181
  // Predicated region
  $region14: #{critic_forward.1} parent=0 // pred_check
    _
  $region15: #{critic_forward.1} parent=0 // pred_check_branch
    %185 = sbr.rel (0) target = $region17
  $region16: #{critic_forward.1} parent=0 // pred_region
    _
  $region17: #{critic_forward.1} parent=0 // pred_fallthru
    _
  // Predicated region
  $region18: #{critic_forward.1} parent=0 // pred_check
    _
  $region19: #{critic_forward.1} parent=0 // pred_check_branch
    %187 = sbr.rel (0) target = $region21
  $region20: #{critic_forward.1} parent=0 // pred_region
    _
  $region21: #{critic_forward.1} parent=0 // pred_fallthru
    _

</llo_original>
